<compile_context>
chip_gen: v5e
topology: v5e:2x2
jax: 0.10.0
libtpu: 0.0.40
codegen_flags: <defaults>
</compile_context>

<pallas_src>
import jax
import jax.numpy as jnp
from jax.experimental import pallas as pl
from jax.experimental.pallas import tpu as pltpu


def _round_up(x: int, m: int) -> int:
    return (x + m - 1) // m * m


def _multilabel_embed_kernel(idx_ref, emb_ref, out_ref, acc_ref):
    """One (row-tile, vocab-tile) grid step.

    idx_ref: (TM, L)  int32 VMEM, pad == -1
    emb_ref: (TV, Dp) f32/bf16 VMEM (vocab slice of the zero-padded table)
    out_ref: (TM, Dp) f32 VMEM (written on the last vocab step)
    acc_ref: (TM, Dp) f32 VMEM scratch accumulator
    """
    k = pl.program_id(1)

    @pl.when(k == 0)
    def _():
        acc_ref[...] = jnp.zeros_like(acc_ref)

    idx = idx_ref[...]                       # (TM, L) int32
    tm, num_labels = idx.shape
    tv = emb_ref.shape[0]

    # Global vocab ids covered by this vocab tile.
    vids = k * tv + jax.lax.broadcasted_iota(jnp.int32, (tm, tv), 1)

    # counts[n, v] = #labels at row n equal to vocab id v.  Pad (-1) never
    # matches; duplicated labels are counted multiple times, matching the
    # reference .sum(0) over repeated embedding rows.
    counts = jnp.zeros((tm, tv), jnp.float32)
    for l in range(num_labels):              # static, small unrolled loop
        counts = counts + (idx[:, l:l + 1] == vids).astype(jnp.float32)

    # Gather-and-sum over this vocab slice == counts @ table-slice, on the MXU.
    counts = counts.astype(emb_ref.dtype)    # bf16 cast is exact (small ints)
    acc_ref[...] += jnp.dot(counts, emb_ref[...],
                            preferred_element_type=jnp.float32)

    @pl.when(k == pl.num_programs(1) - 1)
    def _():
        out_ref[...] = acc_ref[...]


def multilabel_embedding_forward(indices, embedding_matrix, *,
                                 tm: int = 256, tv: int = 512,
                                 use_bf16_mxu: bool = False):
    """indices: int32 [B, S, L] with -1 padding; embedding_matrix: f32 [V, D].

    Returns f32 [B, S, D] = sum of embedding rows of the (non-pad) labels at
    each position, matching MultiLabelEmbeddingLayer.forward in eval mode.
    """
    batch, seq_len, max_labels = indices.shape
    vocab, dim = embedding_matrix.shape
    n = batch * seq_len

    # Tile sizes: row tile / vocab-reduction tile (sublane dims -> multiples of
    # 8, clamped to the array extent), lane-dense embedding dim (multiple 128).
    tm = min(tm, _round_up(n, 8))
    tv = min(tv, _round_up(vocab, 8))
    n_pad = _round_up(n, tm)
    v_pad = _round_up(vocab, tv)
    d_pad = _round_up(dim, 128)

    # Pad rows with -1 (contribute nothing) and the table with zero rows/cols,
    # so out-of-range iota ids in the last vocab tile only hit zero rows.
    idx_flat = indices.reshape(n, max_labels).astype(jnp.int32)
    idx_flat = jnp.pad(idx_flat, ((0, n_pad - n), (0, 0)), constant_values=-1)

    table_dtype = jnp.bfloat16 if use_bf16_mxu else jnp.float32
    emb = jnp.pad(embedding_matrix.astype(table_dtype),
                  ((0, v_pad - vocab), (0, d_pad - dim)))

    grid = (n_pad // tm, v_pad // tv)
    emb_bytes = v_pad * d_pad * emb.dtype.itemsize
    cost = pl.CostEstimate(
        flops=2 * n_pad * v_pad * d_pad,
        transcendentals=0,
        bytes_accessed=(idx_flat.size * 4            # index tiles
                        + emb_bytes * grid[0]        # table streamed per row tile
                        + n_pad * d_pad * 4),        # output
    )

    out = pl.pallas_call(
        _multilabel_embed_kernel,
        out_shape=jax.ShapeDtypeStruct((n_pad, d_pad), jnp.float32),
        grid_spec=pltpu.PrefetchScalarGridSpec(
            num_scalar_prefetch=0,
            grid=grid,
            in_specs=[
                pl.BlockSpec((tm, max_labels), lambda i, k: (i, 0)),
                pl.BlockSpec((tv, d_pad), lambda i, k: (k, 0)),
            ],
            out_specs=pl.BlockSpec((tm, d_pad), lambda i, k: (i, 0)),
            scratch_shapes=[pltpu.VMEM((tm, d_pad), jnp.float32)],
        ),
        compiler_params=pltpu.CompilerParams(
            dimension_semantics=("parallel", "arbitrary"),
            vmem_limit_bytes=48 * 1024 * 1024,
        ),
        cost_estimate=cost,
    )(idx_flat, emb)

    # TODO(synk): training-mode dropout (F.dropout) would use pltpu.prng_seed +
    # pltpu.prng_random_bits; eval-mode (identity) semantics implemented here.
    # TODO(synk): for very large vocab (>~30k) a scalar-prefetch gather path
    # (N*L*D work instead of N*V*D) would beat the counts@emb formulation.
    return out[:n, :dim].reshape(batch, seq_len, dim)


def _reference(indices, embedding_matrix):
    """Pure-JAX reference: gather each label row (pad -> zero row) and sum."""
    vocab, dim = embedding_matrix.shape
    emb_padded = jnp.concatenate(
        [embedding_matrix, jnp.zeros((1, dim), embedding_matrix.dtype)], axis=0)
    safe_idx = jnp.where(indices < 0, vocab, indices)          # pad -> zero row
    gathered = emb_padded[safe_idx]                            # (B, S, L, D)
    return gathered.sum(axis=2)


if __name__ == "__main__":
    key = jax.random.PRNGKey(0)
    k_emb, k_idx, k_len = jax.random.split(key, 3)

    # Small shapes consistent with the module's forward: [batch, seq_len, labels].
    BATCH, SEQ_LEN, MAX_LABELS = 2, 8, 3
    VOCAB, DIM = 64, 32

    # Deterministic "pre-trained" embedding matrix (stands in for torch.randn).
    embedding_matrix = jax.random.normal(k_emb, (VOCAB, DIM), dtype=jnp.float32)

    # Deterministic variable-length multi-label input, densified with pad = -1.
    raw_idx = jax.random.randint(k_idx, (BATCH, SEQ_LEN, MAX_LABELS), 0, VOCAB,
                                 dtype=jnp.int32)
    lens = jax.random.randint(k_len, (BATCH, SEQ_LEN, 1), 1, MAX_LABELS + 1,
                              dtype=jnp.int32)                 # >=1 label each
    lane = jnp.arange(MAX_LABELS, dtype=jnp.int32)[None, None, :]
    indices = jnp.where(lane < lens, raw_idx, -1)              # (B, S, L), pad -1

    out = multilabel_embedding_forward(indices, embedding_matrix)
    out = jax.block_until_ready(out)
    ref = _reference(indices, embedding_matrix)
    assert out.shape == (BATCH, SEQ_LEN, DIM)
    assert jnp.allclose(out, ref, atol=1e-4, rtol=1e-4), "mismatch (f32 path)"

    # Exercise the multi-tile path: 2 row tiles x 4 vocab-reduction tiles,
    # with vocab / dim padding (V=200 -> 256, D=48 -> 128).
    B2, S2, L2, V2, D2 = 4, 16, 3, 200, 48
    emb2 = jax.random.normal(k_emb, (V2, D2), dtype=jnp.float32)
    ridx2 = jax.random.randint(k_idx, (B2, S2, L2), 0, V2, dtype=jnp.int32)
    lens2 = jax.random.randint(k_len, (B2, S2, 1), 1, L2 + 1, dtype=jnp.int32)
    idx2 = jnp.where(jnp.arange(L2, dtype=jnp.int32)[None, None, :] < lens2,
                     ridx2, -1)
    out2 = jax.block_until_ready(
        multilabel_embedding_forward(idx2, emb2, tm=32, tv=64))
    assert jnp.allclose(out2, _reference(idx2, emb2), atol=1e-4, rtol=1e-4), \
        "mismatch (tiled path)"

    # bf16 MXU feed (v5e-friendly) with correspondingly looser tolerance.
    out3 = jax.block_until_ready(
        multilabel_embedding_forward(indices, embedding_matrix,
                                     use_bf16_mxu=True))
    assert jnp.allclose(out3, ref, atol=5e-2, rtol=5e-2), "mismatch (bf16 path)"

    print("KERNEL_OK")
</pallas_src>

<mosaic_0001>
module attributes {stable_mosaic.version = 11 : i64} {
  func.func @_multilabel_embed_kernel(%arg0: i32, %arg1: i32, %arg2: memref<16x3xi32, #tpu.memory_space<vmem>>, %arg3: memref<64x128xf32, #tpu.memory_space<vmem>>, %arg4: memref<16x128xf32, #tpu.memory_space<vmem>>, %arg5: memref<16x128xf32, #tpu.memory_space<vmem>>) attributes {dimension_semantics = [#tpu.dimension_semantics<parallel>, #tpu.dimension_semantics<arbitrary>], iteration_bounds = array<i64: 1, 1>, scalar_prefetch = 0 : i64, scratch_operands = 1 : i64, tpu.core_type = #tpu.core_type<tc>, window_params = [{transform_indices = @transform_0, window_bounds = array<i64: 16, 3>}, {transform_indices = @transform_1, window_bounds = array<i64: 64, 128>}, {transform_indices = @transform_2, window_bounds = array<i64: 16, 128>}]} {
    %c0_i32 = arith.constant 0 : i32
    %0 = arith.cmpi eq, %arg1, %c0_i32 : i32
    %1 = arith.extui %0 : i1 to i32
    %c0_i32_0 = arith.constant 0 : i32
    %2 = arith.cmpi ne, %1, %c0_i32_0 : i32
    scf.if %2 {
      %cst_11 = arith.constant 0.000000e+00 : f32
      %35 = vector.broadcast %cst_11 : f32 to vector<16x128xf32>
      %c0_12 = arith.constant 0 : index
      %c0_13 = arith.constant 0 : index
      %36 = vector.load %arg5[%c0_12, %c0_13] : memref<16x128xf32, #tpu.memory_space<vmem>>, vector<16x128xf32>
      tpu.vector_store %arg5[%c0_12, %c0_13], %35 {strides = array<i32>} : memref<16x128xf32, #tpu.memory_space<vmem>>, vector<16x128xf32>,
    } else {
    }
    %c0 = arith.constant 0 : index
    %c0_1 = arith.constant 0 : index
    %3 = vector.load %arg2[%c0, %c0_1] : memref<16x3xi32, #tpu.memory_space<vmem>>, vector<16x3xi32>
    %c64_i32 = arith.constant 64 : i32
    %4 = arith.muli %arg1, %c64_i32 : i32
    %5 = tpu.iota {dimensions = array<i32: 1>} : vector<16x64xi32>
    %6 = vector.broadcast %4 : i32 to vector<16x64xi32>
    %7 = arith.addi %6, %5 : vector<16x64xi32>
    %cst = arith.constant 0.000000e+00 : f32
    %8 = vector.broadcast %cst : f32 to vector<16x64xf32>
    %9 = vector.extract_strided_slice %3 {offsets = [0, 0], sizes = [16, 1], strides = [1, 1]} : vector<16x3xi32> to vector<16x1xi32>
    %10 = vector.broadcast %9 : vector<16x1xi32> to vector<16x64xi32>
    %11 = arith.cmpi eq, %10, %7 : vector<16x64xi32>
    %12 = arith.extui %11 : vector<16x64xi1> to vector<16x64xi32>
    %13 = arith.sitofp %12 : vector<16x64xi32> to vector<16x64xf32>
    %14 = arith.addf %8, %13 : vector<16x64xf32>
    %15 = vector.extract_strided_slice %3 {offsets = [0, 1], sizes = [16, 1], strides = [1, 1]} : vector<16x3xi32> to vector<16x1xi32>
    %16 = vector.broadcast %15 : vector<16x1xi32> to vector<16x64xi32>
    %17 = arith.cmpi eq, %16, %7 : vector<16x64xi32>
    %18 = arith.extui %17 : vector<16x64xi1> to vector<16x64xi32>
    %19 = arith.sitofp %18 : vector<16x64xi32> to vector<16x64xf32>
    %20 = arith.addf %14, %19 : vector<16x64xf32>
    %21 = vector.extract_strided_slice %3 {offsets = [0, 2], sizes = [16, 1], strides = [1, 1]} : vector<16x3xi32> to vector<16x1xi32>
    %22 = vector.broadcast %21 : vector<16x1xi32> to vector<16x64xi32>
    %23 = arith.cmpi eq, %22, %7 : vector<16x64xi32>
    %24 = arith.extui %23 : vector<16x64xi1> to vector<16x64xi32>
    %25 = arith.sitofp %24 : vector<16x64xi32> to vector<16x64xf32>
    %26 = arith.addf %20, %25 : vector<16x64xf32>
    %c0_2 = arith.constant 0 : index
    %c0_3 = arith.constant 0 : index
    %27 = vector.load %arg5[%c0_2, %c0_3] : memref<16x128xf32, #tpu.memory_space<vmem>>, vector<16x128xf32>
    %c0_4 = arith.constant 0 : index
    %c0_5 = arith.constant 0 : index
    %28 = vector.load %arg3[%c0_4, %c0_5] : memref<64x128xf32, #tpu.memory_space<vmem>>, vector<64x128xf32>
    %cst_6 = arith.constant dense<0.000000e+00> : vector<16x128xf32>
    %29 = tpu.matmul %26, %28, %cst_6 {dimension_numbers = #tpu.dot_dimension_numbers<[1], [0], [0], [1], [0, 0, 1, 1], [], []>} : vector<16x64xf32>, vector<64x128xf32>, vector<16x128xf32> -> vector<16x128xf32>
    %30 = arith.addf %27, %29 : vector<16x128xf32>
    %c0_7 = arith.constant 0 : index
    %c0_8 = arith.constant 0 : index
    %31 = vector.load %arg5[%c0_7, %c0_8] : memref<16x128xf32, #tpu.memory_space<vmem>>, vector<16x128xf32>
    tpu.vector_store %arg5[%c0_7, %c0_8], %30 {strides = array<i32>} : memref<16x128xf32, #tpu.memory_space<vmem>>, vector<16x128xf32>,
    %c0_i32_9 = arith.constant 0 : i32
    %32 = arith.cmpi eq, %arg1, %c0_i32_9 : i32
    %33 = arith.extui %32 : i1 to i32
    %c0_i32_10 = arith.constant 0 : i32
    %34 = arith.cmpi ne, %33, %c0_i32_10 : i32
    scf.if %34 {
      %c0_11 = arith.constant 0 : index
      %c0_12 = arith.constant 0 : index
      %35 = vector.load %arg5[%c0_11, %c0_12] : memref<16x128xf32, #tpu.memory_space<vmem>>, vector<16x128xf32>
      %c0_13 = arith.constant 0 : index
      %c0_14 = arith.constant 0 : index
      %36 = vector.load %arg4[%c0_13, %c0_14] : memref<16x128xf32, #tpu.memory_space<vmem>>, vector<16x128xf32>
      tpu.vector_store %arg4[%c0_13, %c0_14], %35 {strides = array<i32>} : memref<16x128xf32, #tpu.memory_space<vmem>>, vector<16x128xf32>,
    } else {
    }
    return
  }
  func.func @transform_0(%arg0: i32, %arg1: i32) -> (i32, i32) {
    %c0_i32 = arith.constant 0 : i32
    %c0_i32_0 = arith.constant 0 : i32
    return %arg0, %c0_i32 : i32, i32
  }
  func.func @transform_1(%arg0: i32, %arg1: i32) -> (i32, i32) {
    %c0_i32 = arith.constant 0 : i32
    %c0_i32_0 = arith.constant 0 : i32
    return %arg1, %c0_i32 : i32, i32
  }
  func.func @transform_2(%arg0: i32, %arg1: i32) -> (i32, i32) {
    %c0_i32 = arith.constant 0 : i32
    %c0_i32_0 = arith.constant 0 : i32
    return %arg0, %c0_i32 : i32, i32
  }
}

</mosaic_0001>

<llo_original>
// kernel: tpu_custom_call.1
$region0: #{tpu_custom_call.1}
  #allocation0 [shape = 'u32[]', space=smem, size = 0x4, offset = 0x4, fixed_abs, tag = 'smem constant byte address 0x4 - core index']
  #allocation1 [shape = 'u32[72,128]{1,0:T(1,128)}', space=vmem, size = 0x9000, scoped, tag = 'internal scratch']
  #allocation2 [shape = 'f32[16,128]{1,0:T(8,128)}', space=vmem, size = 0x2000, scoped, tag = 'scratch operand']
  %s0 = inlined_call_operand.vmem [shape: s32[16,3], index: 0, kind: input, shape index: {}]
  %s1 = inlined_call_operand.hbm [shape: f32[64,128], index: 1, kind: input, shape index: {}]
  %s2 = inlined_call_operand.hbm [shape: f32[16,128], index: 2, kind: output, shape index: {}]
  %s3 = sld [smem:[#allocation0]]
  $region30: #{tpu_custom_call.1} parent=0
    _
  %s5 = ssub.s32 1, %s3
  %s6 = scalar_select 0, %s5, %s3
  $region1: #{tpu_custom_call.1} parent=0
    #allocation3 [shape = 'u8[32768]{0}', space=vmem, size = 0x8000, scoped, tag = 'input window, operand 1, single buffered']
    #allocation4 [shape = 's32[1]{0}', space=sflag, size = 0x4, scoped, tag = 'scoped memory for tpu_custom_call.1']
    #allocation5 [shape = 's32[1]{0}', space=sflag, size = 0x4, scoped, tag = 'scoped memory for tpu_custom_call.1']
    #allocation6 [shape = 'u8[8192]{0}', space=vmem, size = 0x2000, scoped, tag = 'output window, operand 0, single buffered']
    %7 = vsyncpa [#allocation4], 0
    %8 = vsyncpa [#allocation5], 0
    // Predicated region
    $region2: #{tpu_custom_call.1} parent=1 // pred_check
      _
    $region3: #{tpu_custom_call.1} parent=1 // pred_check_branch
      %10 = sbr.rel (0) target = $region5
    $region4: #{tpu_custom_call.1} parent=1 // pred_region
      _
    $region5: #{tpu_custom_call.1} parent=1 // pred_fallthru
      _
    // Predicated region
    $region6: #{tpu_custom_call.1} parent=1 // pred_check
      _
    $region7: #{tpu_custom_call.1} parent=1 // pred_check_branch
      %12 = sbr.rel (0) target = $region9
    $region8: #{tpu_custom_call.1} parent=1 // pred_region
      %14 = vsyncadd [#allocation4], 0
      %s15 = sshll.u32 %s1, 4
      %s16 = int_to_ptr.hbm [resolvable:$true] %s15
      %s17 = sshll.u32 [#allocation3], 4
      %s18 = int_to_ptr.vmem [resolvable:$true] %s17
      %23 = dma.hbm_to_vmem [thread:$0]  %s16, 1024, %s18, [#allocation4], 128, 128, 8
    $region9: #{tpu_custom_call.1} parent=1 // pred_fallthru
      _
    // Predicated region
    $region10: #{tpu_custom_call.1} parent=1 // pred_check
      _
    $region11: #{tpu_custom_call.1} parent=1 // pred_check_branch
      %25 = sbr.rel (0) target = $region13
    $region12: #{tpu_custom_call.1} parent=1 // pred_region
      %27 = dma.done [#allocation4], 1024
    $region13: #{tpu_custom_call.1} parent=1 // pred_fallthru
      _
    %p28 = scmp.eq.s32.totalorder 0, 0
    // Predicated region
    $region14: #{tpu_custom_call.1} parent=1 // pred_check
      %p29 = pneg %p28
    $region15: #{tpu_custom_call.1} parent=1 // pred_check_branch
      %31 = sbr.rel (%p29) target = $region17
    $region16: #{tpu_custom_call.1} parent=1 // pred_region
      %32 = vst [vmem:[#allocation2] sm:$0xff] 0.0
      %33 = vst [vmem:[#allocation2 + $0x8] sm:$0xff] 0.0
    $region17: #{tpu_custom_call.1} parent=1 // pred_fallthru
      _
    %v34 = vld [vmem:[%s0] sm:$0xff]
    %v35 = vld [vmem:[%s0 + $0x8] sm:$0xff]
    %s36 = smul.u32 0, 64
    %v37 = vlaneseq
    %v38 = vand.u32 %v37, 127
    %v39 = vstv %s36
    %v40 = vadd.s32 %v39, %v38
    %41 = vset.pattern.permute.xlu0 0
    %42 = vperm.xlu0 %41, %v34
    %v43 = vpop.permute.xlu0 %42
    %44 = vset.pattern.permute.xlu0 0
    %45 = vperm.xlu0 %44, %v35
    %v46 = vpop.permute.xlu0 %45
    %vm47 = vcmp.eq.s32.totalorder %v43, %v40
    %vm48 = vcmp.eq.s32.totalorder %v46, %v40
    %v49 = vsel %vm47, 1, 0
    %v50 = vsel %vm48, 1, 0
    %v51 = vcvt.s32.f32 %v49
    %v52 = vcvt.s32.f32 %v50
    %v53 = vadd.f32 %v51, 0.0
    %v54 = vadd.f32 %v52, 0.0
    %55 = vset.pattern.permute.xlu0 1
    %56 = vperm.xlu0 %55, %v34
    %v57 = vpop.permute.xlu0 %56
    %58 = vset.pattern.permute.xlu0 1
    %59 = vperm.xlu0 %58, %v35
    %v60 = vpop.permute.xlu0 %59
    %vm61 = vcmp.eq.s32.totalorder %v57, %v40
    %vm62 = vcmp.eq.s32.totalorder %v60, %v40
    %v63 = vsel %vm61, 1, 0
    %v64 = vsel %vm62, 1, 0
    %v65 = vcvt.s32.f32 %v63
    %v66 = vcvt.s32.f32 %v64
    %v67 = vadd.f32 %v53, %v65
    %v68 = vadd.f32 %v54, %v66
    %69 = vset.pattern.permute.xlu0 2
    %70 = vperm.xlu0 %69, %v34
    %v71 = vpop.permute.xlu0 %70
    %72 = vset.pattern.permute.xlu0 2
    %73 = vperm.xlu0 %72, %v35
    %v74 = vpop.permute.xlu0 %73
    %vm75 = vcmp.eq.s32.totalorder %v71, %v40
    %vm76 = vcmp.eq.s32.totalorder %v74, %v40
    %v77 = vsel %vm75, 1, 0
    %v78 = vsel %vm76, 1, 0
    %v79 = vcvt.s32.f32 %v77
    %v80 = vcvt.s32.f32 %v78
    %v81 = vadd.f32 %v67, %v79
    %v82 = vadd.f32 %v68, %v80
    %v83 = vld [vmem:[#allocation2] sm:$0xff]
    %v84 = vld [vmem:[#allocation2 + $0x8] sm:$0xff]
    %v85 = vld [vmem:[#allocation3] sm:$0xff]
    %v86 = vld [vmem:[#allocation3 + $0x8] sm:$0xff]
    %v87 = vld [vmem:[#allocation3 + $0x10] sm:$0xff]
    %v88 = vld [vmem:[#allocation3 + $0x18] sm:$0xff]
    %v89 = vld [vmem:[#allocation3 + $0x20] sm:$0xff]
    %v90 = vld [vmem:[#allocation3 + $0x28] sm:$0xff]
    %v91 = vld [vmem:[#allocation3 + $0x30] sm:$0xff]
    %v92 = vld [vmem:[#allocation3 + $0x38] sm:$0xff]
    %vm93 = vcmask 523264
    %v95 = vsel %vm93, %v81, 0
    %v98 = vsel %vm93, %v82, 0
    %100 = vmatpush.msra.mxu0 0.0
    %101 = vmatpush.msra.mxu0 0.0
    %102 = vmatpush.msra.mxu0 0.0
    %103 = vmatpush.msra.mxu0 0.0
    %104 = vmatpush.msra.mxu0 0.0
    %105 = vmatpush.msra.mxu0 0.0
    %106 = vmatpush.msra.mxu0 0.0
    %107 = vmatpush.msra.mxu0 0.0
    %108 = vmatpush.msra.mxu0 %v92
    %109 = vmatpush.msra.mxu0 %v91
    %110 = vmatpush.msra.mxu0 %v90
    %111 = vmatpush.msra.mxu0 %v89
    %112 = vmatpush.msra.mxu0 %v88
    %113 = vmatpush.msra.mxu0 %v87
    %114 = vmatpush.msra.mxu0 %v86
    %115 = vmatpush.msra.mxu0 %v85
    %116 = vmatmul.f32.gmra.mxu0 %v95
    %v117 = vpop.f32.mrf.mxu0
    %v118 = vadd.f32 0.0, %v117
    %119 = vmatmul.f32.gmra.mxu0 %v98
    %v120 = vpop.f32.mrf.mxu0
    %v121 = vadd.f32 0.0, %v120
    %122 = vdwg.mxu0
    %v123 = vadd.f32 %v83, %v118
    %v124 = vadd.f32 %v84, %v121
    %125 = vst [vmem:[#allocation2] sm:$0xff] %v123
    %126 = vst [vmem:[#allocation2 + $0x8] sm:$0xff] %v124
    // Predicated region
    $region18: #{tpu_custom_call.1} parent=1 // pred_check
      %p127 = pneg %p28
    $region19: #{tpu_custom_call.1} parent=1 // pred_check_branch
      %129 = sbr.rel (%p127) target = $region21
    $region20: #{tpu_custom_call.1} parent=1 // pred_region
      %v130 = vld [vmem:[#allocation2] sm:$0xff]
      %v131 = vld [vmem:[#allocation2 + $0x8] sm:$0xff]
      %132 = vst [vmem:[#allocation6] sm:$0xff] %v130
      %133 = vst [vmem:[#allocation6 + $0x8] sm:$0xff] %v131
    $region21: #{tpu_custom_call.1} parent=1 // pred_fallthru
      _
    // Predicated region
    $region22: #{tpu_custom_call.1} parent=1 // pred_check
      _
    $region23: #{tpu_custom_call.1} parent=1 // pred_check_branch
      %135 = sbr.rel (0) target = $region25
    $region24: #{tpu_custom_call.1} parent=1 // pred_region
      %137 = vsyncadd [#allocation5], 0
      %s138 = sshll.u32 [#allocation6], 4
      %s139 = int_to_ptr.vmem [resolvable:$true] %s138
      %s140 = sshll.u32 %s2, 4
      %s141 = int_to_ptr.hbm [resolvable:$true] %s140
      %146 = dma.vmem_to_hbm [thread:$0]  %s139, 256, %s141, [#allocation5], 128, 128, 8
    $region25: #{tpu_custom_call.1} parent=1 // pred_fallthru
      _
    // Predicated region
    $region26: #{tpu_custom_call.1} parent=1 // pred_check
      _
    $region27: #{tpu_custom_call.1} parent=1 // pred_check_branch
      %148 = sbr.rel (0) target = $region29
    $region28: #{tpu_custom_call.1} parent=1 // pred_region
      %150 = dma.done [#allocation5], 256
    $region29: #{tpu_custom_call.1} parent=1 // pred_fallthru
      _
    %151 = vsyncpa [#allocation4], 1
    %152 = vsyncpa [#allocation5], 1

</llo_original>
